<compile_context>
chip_gen: v6e
topology: v6e:2x2x1
jax: 0.10.0
libtpu: 0.0.40
codegen_flags: <defaults>
</compile_context>

<pallas_src>
import jax
import jax.numpy as jnp
from jax.experimental import pallas as pl
from jax.experimental.pallas import tpu as pltpu


def _round_up(x: int, m: int) -> int:
    return ((x + m - 1) // m) * m


def _sublane(dtype) -> int:
    # 8 for 4-byte dtypes, 16 for 2-byte, 32 for 1-byte.
    return max(8, 32 // jnp.dtype(dtype).itemsize)


# --------------------------------------------------------------------------
# Fast path: W and bias fully resident in VMEM, single K step, grid over M.
# --------------------------------------------------------------------------
def _affine_fullkn_kernel(x_ref, w_ref, b_ref, o_ref):
    o_ref[...] = (
        jnp.dot(x_ref[...], w_ref[...], preferred_element_type=jnp.float32)
        + b_ref[...].astype(jnp.float32)
    ).astype(o_ref.dtype)


# --------------------------------------------------------------------------
# General path: (M, N, K) grid, f32 VMEM accumulator, K is the trailing
# "arbitrary" axis; M/N are "parallel" (megacore sharding on v7x).
# --------------------------------------------------------------------------
def _affine_tiled_kernel(x_ref, w_ref, b_ref, o_ref, acc_ref):
    k = pl.program_id(2)
    partial = jnp.dot(x_ref[...], w_ref[...], preferred_element_type=jnp.float32)

    # Direct write on the first K step (saves a full (tm,tn) zero store+read
    # per output tile), accumulate afterwards.
    @pl.when(k == 0)
    def _():
        acc_ref[...] = partial

    @pl.when(k > 0)
    def _():
        acc_ref[...] += partial

    # Epilogue: bias add + cast exactly once per output tile.
    @pl.when(k == pl.num_programs(2) - 1)
    def _():
        o_ref[...] = (acc_ref[...] + b_ref[...].astype(jnp.float32)).astype(o_ref.dtype)


def additional_module_forward(
    x: jax.Array,
    w: jax.Array,
    b: jax.Array,
    *,
    tm: int | None = None,
    tn: int | None = None,
    tk: int | None = None,
    compute_dtype=None,
) -> jax.Array:
    """Concrete AdditionalModule forward: (?, in_features) -> (?, out_features).

    compute_dtype: optionally cast x/W (e.g. jnp.bfloat16) before the MXU matmul
    (f32 accumulation is kept). Worthwhile on v6e/v7x when numerics allow.
    """
    batch, in_features = x.shape
    k_w, out_features = w.shape
    assert in_features == k_w
    b = jnp.asarray(b).reshape(1, out_features)

    if compute_dtype is not None:
        x = x.astype(compute_dtype)
        w = w.astype(compute_dtype)

    itemsize = jnp.dtype(x.dtype).itemsize
    sub = _sublane(x.dtype)
    out_dtype = x.dtype

    flops = 2 * batch * out_features * in_features
    bytes_accessed = itemsize * (
        batch * in_features + in_features * out_features + out_features
    ) + jnp.dtype(out_dtype).itemsize * batch * out_features
    cost = pl.CostEstimate(
        flops=flops, transcendentals=0, bytes_accessed=bytes_accessed
    )

    # ---------------- fast path: full-K / full-N blocks, grid over M only ----
    FAST_PATH_BUDGET = 24 << 20  # double-buffered bytes, under the 48 MiB limit
    tm_fast = batch if batch <= 512 else 512
    fast_bytes = 2 * itemsize * (
        tm_fast * in_features          # x tile
        + in_features * out_features   # full W
        + out_features                 # bias
        + tm_fast * out_features       # out tile
    )
    if tm is None and tn is None and tk is None and fast_bytes <= FAST_PATH_BUDGET:
        m_p = _round_up(batch, tm_fast)
        x_p = x if m_p == batch else jnp.pad(x, ((0, m_p - batch), (0, 0)))
        out_p = pl.pallas_call(
            _affine_fullkn_kernel,
            out_shape=jax.ShapeDtypeStruct((m_p, out_features), out_dtype),
            grid_spec=pltpu.PrefetchScalarGridSpec(
                num_scalar_prefetch=0,
                grid=(m_p // tm_fast,),
                in_specs=[
                    # block dims equal to the full array dims are legal even if
                    # not (8,128)-divisible -> no K/N padding needed.
                    pl.BlockSpec((tm_fast, in_features), lambda i: (i, 0)),
                    pl.BlockSpec((in_features, out_features), lambda i: (0, 0)),
                    pl.BlockSpec((1, out_features), lambda i: (0, 0)),
                ],
                out_specs=pl.BlockSpec((tm_fast, out_features), lambda i: (i, 0)),
            ),
            compiler_params=pltpu.CompilerParams(
                dimension_semantics=("parallel",),
                vmem_limit_bytes=48 << 20,
            ),
            cost_estimate=cost,
        )(x_p, w, b)
        return out_p if m_p == batch else out_p[:batch]

    # ---------------- general tiled path -------------------------------------
    if tm is None:
        tm = min(512, _round_up(batch, sub))
    if tn is None:
        n_r = _round_up(out_features, 128)
        tn = n_r if n_r <= 1024 else 512      # prefer full N: x streams once
    if tk is None:
        k_r = _round_up(in_features, 128)
        tk = k_r if k_r <= 2048 else 1024     # prefer full K: no reduction axis

    m_p = _round_up(batch, tm)
    k_p = _round_up(in_features, tk)
    n_p = _round_up(out_features, tn)

    # Only pad when actually required (zero K/N padding leaves the math exact).
    x_p = x if (m_p, k_p) == (batch, in_features) else jnp.pad(
        x, ((0, m_p - batch), (0, k_p - in_features)))
    w_p = w if (k_p, n_p) == (in_features, out_features) else jnp.pad(
        w, ((0, k_p - in_features), (0, n_p - out_features)))
    b_p = b if n_p == out_features else jnp.pad(b, ((0, 0), (0, n_p - out_features)))

    grid = (m_p // tm, n_p // tn, k_p // tk)

    out_p = pl.pallas_call(
        _affine_tiled_kernel,
        out_shape=jax.ShapeDtypeStruct((m_p, n_p), out_dtype),
        grid_spec=pltpu.PrefetchScalarGridSpec(
            num_scalar_prefetch=0,
            grid=grid,
            in_specs=[
                pl.BlockSpec((tm, tk), lambda i, j, k: (i, k)),  # x tile
                pl.BlockSpec((tk, tn), lambda i, j, k: (k, j)),  # W tile
                pl.BlockSpec((1, tn), lambda i, j, k: (0, j)),   # bias tile
            ],
            out_specs=pl.BlockSpec((tm, tn), lambda i, j, k: (i, j)),
            scratch_shapes=[pltpu.VMEM((tm, tn), jnp.float32)],
        ),
        compiler_params=pltpu.CompilerParams(
            dimension_semantics=("parallel", "parallel", "arbitrary"),
            vmem_limit_bytes=48 << 20,
        ),
        cost_estimate=cost,
    )(x_p, w_p, b_p)

    if (m_p, n_p) == (batch, out_features):
        return out_p
    return out_p[:batch, :out_features]


if __name__ == "__main__":
    key = jax.random.PRNGKey(0)
    kx, kw, kb, kx2, kw2, kb2 = jax.random.split(key, 6)

    # Small demo consistent with the (?, input_features) contract — exercises
    # the fast path (full-K/full-N resident, grid over M, no padding).
    batch, input_features, output_features = 8, 32, 16
    x = jax.random.normal(kx, (batch, input_features), dtype=jnp.float32)
    w = jax.random.normal(kw, (input_features, output_features), dtype=jnp.float32) * 0.05
    b = jax.random.normal(kb, (output_features,), dtype=jnp.float32) * 0.01

    out = additional_module_forward(x, w, b)
    jax.block_until_ready(out)
    ref = x @ w + b[None, :]
    assert out.shape == (batch, output_features)
    assert jnp.allclose(out, ref, atol=1e-5, rtol=1e-5)

    # Second check: force the general (M, N, K) tiled path with explicit small
    # tiles so the multi-step accumulator (direct write at k==0, += after,
    # epilogue at k==last) is exercised at modest shapes.
    b2_m, b2_k, b2_n = 384, 640, 384
    x2 = jax.random.normal(kx2, (b2_m, b2_k), dtype=jnp.float32) * 0.1
    w2 = jax.random.normal(kw2, (b2_k, b2_n), dtype=jnp.float32) * 0.05
    bias2 = jax.random.normal(kb2, (1, b2_n), dtype=jnp.float32) * 0.01

    out2 = additional_module_forward(x2, w2, bias2, tm=128, tn=128, tk=256)
    jax.block_until_ready(out2)
    ref2 = x2 @ w2 + bias2
    assert out2.shape == (b2_m, b2_n)
    assert jnp.allclose(out2, ref2, atol=1e-4, rtol=1e-4)

    print("KERNEL_OK")
</pallas_src>

<mosaic_0001>
module attributes {stable_mosaic.version = 11 : i64} {
  func.func @_affine_fullkn_kernel(%arg0: i32, %arg1: memref<8x32xf32, #tpu.memory_space<vmem>>, %arg2: memref<32x16xf32, #tpu.memory_space<vmem>>, %arg3: memref<1x16xf32, #tpu.memory_space<vmem>>, %arg4: memref<8x16xf32, #tpu.memory_space<vmem>>) attributes {dimension_semantics = [#tpu.dimension_semantics<parallel>], iteration_bounds = array<i64: 1>, scalar_prefetch = 0 : i64, scratch_operands = 0 : i64, tpu.core_type = #tpu.core_type<tc>, window_params = [{transform_indices = @transform_0, window_bounds = array<i64: 8, 32>}, {pipeline_mode = #tpu.pipeline_mode<synchronous>, transform_indices = @transform_1, window_bounds = array<i64: 32, 16>}, {pipeline_mode = #tpu.pipeline_mode<synchronous>, transform_indices = @transform_2, window_bounds = array<i64: 1, 16>}, {transform_indices = @transform_3, window_bounds = array<i64: 8, 16>}]} {
    %c0 = arith.constant 0 : index
    %c0_0 = arith.constant 0 : index
    %0 = vector.load %arg1[%c0, %c0_0] : memref<8x32xf32, #tpu.memory_space<vmem>>, vector<8x32xf32>
    %c0_1 = arith.constant 0 : index
    %c0_2 = arith.constant 0 : index
    %1 = vector.load %arg2[%c0_1, %c0_2] : memref<32x16xf32, #tpu.memory_space<vmem>>, vector<32x16xf32>
    %cst = arith.constant dense<0.000000e+00> : vector<8x16xf32>
    %2 = tpu.matmul %0, %1, %cst {dimension_numbers = #tpu.dot_dimension_numbers<[1], [0], [0], [1], [0, 0, 1, 1], [], []>} : vector<8x32xf32>, vector<32x16xf32>, vector<8x16xf32> -> vector<8x16xf32>
    %c0_3 = arith.constant 0 : index
    %c0_4 = arith.constant 0 : index
    %3 = vector.load %arg3[%c0_3, %c0_4] : memref<1x16xf32, #tpu.memory_space<vmem>>, vector<1x16xf32>
    %4 = vector.broadcast %3 : vector<1x16xf32> to vector<8x16xf32>
    %5 = arith.addf %2, %4 : vector<8x16xf32>
    %c0_5 = arith.constant 0 : index
    %c0_6 = arith.constant 0 : index
    %6 = vector.load %arg4[%c0_5, %c0_6] : memref<8x16xf32, #tpu.memory_space<vmem>>, vector<8x16xf32>
    tpu.vector_store %arg4[%c0_5, %c0_6], %5 {strides = array<i32>} : memref<8x16xf32, #tpu.memory_space<vmem>>, vector<8x16xf32>,
    return
  }
  func.func @transform_0(%arg0: i32) -> (i32, i32) {
    %c0_i32 = arith.constant 0 : i32
    %c0_i32_0 = arith.constant 0 : i32
    return %arg0, %c0_i32 : i32, i32
  }
  func.func @transform_1(%arg0: i32) -> (i32, i32) {
    %c0_i32 = arith.constant 0 : i32
    %c0_i32_0 = arith.constant 0 : i32
    %c0_i32_1 = arith.constant 0 : i32
    return %c0_i32, %c0_i32_0 : i32, i32
  }
  func.func @transform_2(%arg0: i32) -> (i32, i32) {
    %c0_i32 = arith.constant 0 : i32
    %c0_i32_0 = arith.constant 0 : i32
    %c0_i32_1 = arith.constant 0 : i32
    return %c0_i32, %c0_i32_0 : i32, i32
  }
  func.func @transform_3(%arg0: i32) -> (i32, i32) {
    %c0_i32 = arith.constant 0 : i32
    %c0_i32_0 = arith.constant 0 : i32
    return %arg0, %c0_i32 : i32, i32
  }
}

</mosaic_0001>

<llo_original>
// kernel: tpu_custom_call.1
$region0: #{tpu_custom_call.1}
  #allocation0 [shape = 'u32[]', space=smem, size = 0x4, offset = 0x4, fixed_abs, tag = 'smem constant byte address 0x4 - core index']
  #allocation1 [shape = 'u32[144,128]{1,0:T(1,128)}', space=vmem, size = 0x12000, scoped, tag = 'internal scratch']
  %s0 = inlined_call_operand.vmem [shape: f32[8,32], index: 0, kind: input, shape index: {}]
  %s1 = inlined_call_operand.vmem [shape: f32[32,16], index: 1, kind: input, shape index: {}]
  %s2 = inlined_call_operand.vmem [shape: f32[1,16], index: 2, kind: input, shape index: {}]
  %s3 = inlined_call_operand.hbm [shape: f32[8,16], index: 3, kind: output, shape index: {}]
  %s4 = sld [smem:[#allocation0]]
  $region22: #{tpu_custom_call.1} parent=0
    _
  %s6 = ssub.s32 1, %s4
  %s7 = scalar_select 0, %s6, %s4
  $region1: #{tpu_custom_call.1} parent=0
    #allocation2 [shape = 'u8[4096]{0}', space=vmem, size = 0x1000, scoped, tag = 'output window, operand 0, single buffered']
    #allocation3 [shape = 's32[1]{0}', space=sflag, size = 0x4, scoped, tag = 'scoped memory for tpu_custom_call.1']
    %8 = vsyncpa [#allocation3], 0
    // Predicated region
    $region2: #{tpu_custom_call.1} parent=1 // pred_check
      _
    $region3: #{tpu_custom_call.1} parent=1 // pred_check_branch
      %10 = sbr.rel (0) target = $region5
    $region4: #{tpu_custom_call.1} parent=1 // pred_region
      _
    $region5: #{tpu_custom_call.1} parent=1 // pred_fallthru
      _
    // Predicated region
    $region6: #{tpu_custom_call.1} parent=1 // pred_check
      _
    $region7: #{tpu_custom_call.1} parent=1 // pred_check_branch
      %12 = sbr.rel (0) target = $region9
    $region8: #{tpu_custom_call.1} parent=1 // pred_region
      _
    $region9: #{tpu_custom_call.1} parent=1 // pred_fallthru
      _
    // Predicated region
    $region10: #{tpu_custom_call.1} parent=1 // pred_check
      _
    $region11: #{tpu_custom_call.1} parent=1 // pred_check_branch
      %14 = sbr.rel (0) target = $region13
    $region12: #{tpu_custom_call.1} parent=1 // pred_region
      _
    $region13: #{tpu_custom_call.1} parent=1 // pred_fallthru
      _
    %v15 = vld [vmem:[%s0] sm:$0xff]
    %v16 = vld [vmem:[%s1] sm:$0xff]
    %v17 = vld [vmem:[%s1 + $0x8] sm:$0xff]
    %v18 = vld [vmem:[%s1 + $0x10] sm:$0xff]
    %v19 = vld [vmem:[%s1 + $0x18] sm:$0xff]
    %v20 = vld [vmem:[%s2] sm:$0x1]
    %v22 = vlaneseq
    %v23 = vshrl.u32 %v22, 7
    %v24 = vsub.s32 0, %v23
    %v25 = vrot.slane %v20, %v24
    %vm27 = vcmask 261120
    %v29 = vsel %vm27, %v15, 0
    %31 = vmatprep.subr.mxu0 0.0
    %32 = vmatpush1.msra.mxu0 0.0
    %33 = vmatprep.subr.mxu0 0.0
    %34 = vmatpush1.msra.mxu0 0.0
    %35 = vmatprep.subr.mxu0 0.0
    %36 = vmatpush1.msra.mxu0 0.0
    %37 = vmatprep.subr.mxu0 0.0
    %38 = vmatpush1.msra.mxu0 0.0
    %39 = vmatprep.subr.mxu0 0.0
    %40 = vmatpush1.msra.mxu0 0.0
    %41 = vmatprep.subr.mxu0 0.0
    %42 = vmatpush1.msra.mxu0 0.0
    %43 = vmatprep.subr.mxu0 0.0
    %44 = vmatpush1.msra.mxu0 0.0
    %45 = vmatprep.subr.mxu0 0.0
    %46 = vmatpush1.msra.mxu0 0.0
    %47 = vmatprep.subr.mxu0 0.0
    %48 = vmatpush1.msra.mxu0 0.0
    %49 = vmatprep.subr.mxu0 0.0
    %50 = vmatpush1.msra.mxu0 0.0
    %51 = vmatprep.subr.mxu0 0.0
    %52 = vmatpush1.msra.mxu0 0.0
    %53 = vmatprep.subr.mxu0 0.0
    %54 = vmatpush1.msra.mxu0 0.0
    %55 = vmatprep.subr.mxu0 0.0
    %56 = vmatpush1.msra.mxu0 %v19
    %57 = vmatprep.subr.mxu0 0.0
    %58 = vmatpush1.msra.mxu0 %v18
    %59 = vmatprep.subr.mxu0 0.0
    %60 = vmatpush1.msra.mxu0 %v17
    %61 = vmatprep.subr.mxu0 0.0
    %62 = vmatpush1.msra.mxu0 %v16
    %63 = vmatprep.subr.mxu0 0.0
    %64 = vmatpush2.msra.mxu0 0.0
    %65 = vmatprep.subr.mxu0 0.0
    %66 = vmatpush2.msra.mxu0 0.0
    %67 = vmatprep.subr.mxu0 0.0
    %68 = vmatpush2.msra.mxu0 0.0
    %69 = vmatprep.subr.mxu0 0.0
    %70 = vmatpush2.msra.mxu0 0.0
    %71 = vmatprep.subr.mxu0 0.0
    %72 = vmatpush2.msra.mxu0 0.0
    %73 = vmatprep.subr.mxu0 0.0
    %74 = vmatpush2.msra.mxu0 0.0
    %75 = vmatprep.subr.mxu0 0.0
    %76 = vmatpush2.msra.mxu0 0.0
    %77 = vmatprep.subr.mxu0 0.0
    %78 = vmatpush2.msra.mxu0 0.0
    %79 = vmatprep.subr.mxu0 0.0
    %80 = vmatpush2.msra.mxu0 0.0
    %81 = vmatprep.subr.mxu0 0.0
    %82 = vmatpush2.msra.mxu0 0.0
    %83 = vmatprep.subr.mxu0 0.0
    %84 = vmatpush2.msra.mxu0 0.0
    %85 = vmatprep.subr.mxu0 0.0
    %86 = vmatpush2.msra.mxu0 0.0
    %87 = vmatprep.subr.mxu0 0.0
    %88 = vmatpush2.msra.mxu0 0.0
    %89 = vmatprep.subr.mxu0 0.0
    %90 = vmatpush2.msra.mxu0 0.0
    %91 = vmatprep.subr.mxu0 0.0
    %92 = vmatpush2.msra.mxu0 0.0
    %93 = vmatprep.subr.mxu0 0.0
    %94 = vmatpush2.msra.mxu0 0.0
    %95 = vmatprep.mubr.f32.mxu0 0.0
    %96 = vmatmul.mubr.f32.gmra.mxu0 %v29
    %v97 = vpop.f32.mrf.mxu0
    %v98 = vadd.f32 %v25, %v97
    %v99 = vpop.f32.mrf.mxu0
    %100 = vdwg.mxu0
    %vm101 = vcmask 130048
    %102 = vst.msk [vmem:[#allocation2] sm:$0xff] %vm101, %v98
    // Predicated region
    $region14: #{tpu_custom_call.1} parent=1 // pred_check
      _
    $region15: #{tpu_custom_call.1} parent=1 // pred_check_branch
      %104 = sbr.rel (0) target = $region17
    $region16: #{tpu_custom_call.1} parent=1 // pred_region
      %s106 = ssub.s32 128, 128
      %107 = vsyncadd [#allocation3], %s106
      %s109 = sshll.u32 [#allocation2], 4
      %s110 = int_to_ptr.vmem [resolvable:$true] %s109
      %112 = dma.vmem_to_hbm [thread:$0]  %s110, 128, %s3, [#allocation3]
    $region17: #{tpu_custom_call.1} parent=1 // pred_fallthru
      _
    // Predicated region
    $region18: #{tpu_custom_call.1} parent=1 // pred_check
      _
    $region19: #{tpu_custom_call.1} parent=1 // pred_check_branch
      %114 = sbr.rel (0) target = $region21
    $region20: #{tpu_custom_call.1} parent=1 // pred_region
      %115 = dma.done [#allocation3], 128
    $region21: #{tpu_custom_call.1} parent=1 // pred_fallthru
      _
    %116 = vsyncpa [#allocation3], 1

</llo_original>
